<compile_context>
chip_gen: v6e
topology: v6e:2x2x1
jax: 0.10.0
libtpu: 0.0.40
codegen_flags: <defaults>
</compile_context>

<pallas_src>
import functools

import jax
import jax.numpy as jnp
from jax.experimental import pallas as pl
from jax.experimental.pallas import tpu as pltpu

LANE = 128      # vreg lane width (last dim)
SUBLANE = 8     # f32 sublane granularity (second-to-last dim)


def _round_up(x: int, m: int) -> int:
    return ((x + m - 1) // m) * m


def _vmem_capacity_bytes() -> int:
    """Physical VMEM per TensorCore; conservative fallback if query fails."""
    try:
        return int(pltpu.get_tpu_info().vmem_capacity_bytes)
    except Exception:
        return 64 * 1024 * 1024   # v7x-safe default


def _resident_spec(shape):
    """Full-block, grid-invariant operand: single-buffered (no gain from a
    second pipeline buffer when the block index is constant)."""
    try:
        return pl.BlockSpec(shape, lambda i: (0, 0), pipeline_mode=pl.Buffered(1))
    except Exception:
        # Older JAX without pipeline_mode: fall back to default buffering.
        return pl.BlockSpec(shape, lambda i: (0, 0))


def _choose_tiling(M: int, *, tm_target: int, tm_budget: int):
    """Pick (tm, m_pad): tm multiple of 8, preferably dividing round_up(M, 8)
    exactly (no wrapper pad/slice), >= 2 grid steps when M >= 128."""
    m8 = _round_up(max(M, 1), SUBLANE)
    q = m8 // SUBLANE
    cap_rows = max(1, min(tm_target, tm_budget) // SUBLANE)
    if m8 >= 128:
        # Guarantee >= 2 grid steps so "parallel" shards across both TCs (v7x).
        cap_rows = min(cap_rows, max(1, q // 2))
    cap_rows = min(cap_rows, q)

    # Prefer a tile that divides m8 exactly -> no M padding at all.
    d = cap_rows
    while d >= 1 and q % d != 0:
        d -= 1
    if d >= 1 and (d * 4 >= cap_rows or d * SUBLANE >= 64):
        return d * SUBLANE, m8

    # Pathological row counts (e.g. prime): pad minimally instead of taking
    # many tiny grid steps (~0.35 us each).
    n_tiles = -(-q // cap_rows)
    tm = _round_up(-(-m8 // n_tiles), SUBLANE)
    return tm, n_tiles * tm


def _fused_mlp_kernel(*refs, num_layers: int, compute_dtype):
    """refs = (x_ref, w0, b0, w1, b1, ..., o_ref).

    x_ref: (TM, K0) tile of the token stream.
    wi:    (Ki, Ki+1) pre-transposed weight, full block, VMEM-resident
           (stored in compute_dtype when bf16 compute is requested).
    bi:    (1, Ki+1) f32 bias, full block.
    o_ref: (TM, N_pad) lane-dense output tile.
    Per-layer intermediates live only in vregs/VMEM.
    """
    x_ref = refs[0]
    o_ref = refs[-1]
    wb = refs[1:-1]

    x = x_ref[...]
    for i in range(num_layers):
        w = wb[2 * i][...]
        b = wb[2 * i + 1][...]
        if compute_dtype is None:
            lhs, rhs = x, w
        else:
            lhs = x if x.dtype == compute_dtype else x.astype(compute_dtype)
            rhs = w if w.dtype == compute_dtype else w.astype(compute_dtype)
        y = jnp.dot(lhs, rhs, preferred_element_type=jnp.float32)
        y = y + b.astype(jnp.float32)          # (1, N) broadcasts over TM rows
        if i < num_layers - 1:
            y = jnp.maximum(y, 0.0)            # ReLU on hidden layers only
        x = y
    o_ref[...] = x.astype(o_ref.dtype)


def mlp_forward_pallas(x2d, weights, biases2d, n_out, *, tm=None,
                       compute_dtype=None):
    """Fused MLP forward.

    x2d:      (M, K0) activations (leading dims already flattened).
    weights:  list of (K_i, K_{i+1}) pre-transposed (and lane-padded) weights.
    biases2d: list of (1, K_{i+1}) f32 biases.
    n_out:    true (unpadded) output feature count.
    """
    M, K0 = x2d.shape
    num_layers = len(weights)
    n_out_p = weights[-1].shape[1]
    act_dtype = x2d.dtype
    act_isz = jnp.dtype(act_dtype).itemsize

    # ---- Resident-parameter footprint (single-buffered).
    param_bytes = 0
    for w, b in zip(weights, biases2d):
        param_bytes += w.size * jnp.dtype(w.dtype).itemsize
        param_bytes += b.size * jnp.dtype(b.dtype).itemsize

    # ---- Generation-aware VMEM budget (leave compiler headroom).
    cap = _vmem_capacity_bytes()
    budget_cap = int(cap * 0.85)          # ~54 MiB v7x, ~109 MiB v5e/v6e

    max_width = max(max(w.shape[1] for w in weights), K0)
    per_row_bytes = 2 * (K0 + n_out_p) * act_isz + 3 * max_width * 4
    avail = budget_cap - param_bytes - (4 << 20)
    if avail > 0:
        tm_budget = max(SUBLANE, (avail // per_row_bytes) // SUBLANE * SUBLANE)
    else:
        tm_budget = SUBLANE
    tm_target = 512 if cap >= 96 * 1024 * 1024 else 256   # bigger tiles on 128 MiB parts

    if tm is not None:
        tm = max(SUBLANE, _round_up(int(tm), SUBLANE))
        m_pad = _round_up(M, tm)
    else:
        tm, m_pad = _choose_tiling(M, tm_target=tm_target, tm_budget=tm_budget)

    if m_pad != M:   # at most a few sublane rows unless M is pathological
        x2d = jnp.pad(x2d, ((0, m_pad - M), (0, 0)))
    grid = (m_pad // tm,)

    # ---- BlockSpecs: x/out tiled over M, params resident + single-buffered.
    in_specs = [pl.BlockSpec((tm, K0), lambda i: (i, 0))]
    operands = [x2d]
    for w, b in zip(weights, biases2d):
        in_specs.append(_resident_spec(w.shape))
        in_specs.append(_resident_spec(b.shape))
        operands.append(w)
        operands.append(b)
    out_specs = pl.BlockSpec((tm, n_out_p), lambda i: (i, 0))   # lane-dense

    # ---- Cost estimate for XLA's scheduler.
    flops = sum(2 * m_pad * w.shape[0] * w.shape[1] for w in weights)
    bytes_accessed = (m_pad * K0 * act_isz + param_bytes
                      + m_pad * n_out_p * act_isz)
    cost = pl.CostEstimate(flops=flops, transcendentals=0,
                           bytes_accessed=bytes_accessed)

    # ---- Exact-ish working set: params (x1) + double-buffered x/out tiles
    #      + live f32 intermediates; 1.5x margin, clamped by generation cap.
    need = (param_bytes
            + 2 * tm * (K0 + n_out_p) * act_isz
            + 3 * tm * max_width * 4)
    vmem_limit = int(min(budget_cap, max(int(1.5 * need), 32 * 1024 * 1024)))

    kernel = functools.partial(_fused_mlp_kernel,
                               num_layers=num_layers,
                               compute_dtype=compute_dtype)

    out = pl.pallas_call(
        kernel,
        out_shape=jax.ShapeDtypeStruct((m_pad, n_out_p), act_dtype),
        grid_spec=pl.GridSpec(grid=grid, in_specs=in_specs, out_specs=out_specs),
        compiler_params=pltpu.CompilerParams(
            dimension_semantics=("parallel",),   # shard M tiles across TCs
            vmem_limit_bytes=vmem_limit,
        ),
        cost_estimate=cost,
    )(*operands)

    if m_pad != M or n_out_p != n_out:
        out = out[:M, :n_out]
    return out


class MLPPallas:
    """Mirror of the PyTorch MLP; forward runs in one fused Pallas kernel."""

    def __init__(self, input_dim, hidden_dim, output_dim, num_layers, key,
                 compute_dtype=None, lane_pad=True):
        # compute_dtype=jnp.bfloat16 is recommended on v6e/v7x (weights are
        # then STORED in bf16; accumulation + epilogue stay f32).
        self.num_layers = num_layers
        self.output_dim = output_dim
        self.compute_dtype = compute_dtype
        w_store = compute_dtype if compute_dtype is not None else jnp.float32

        h = [hidden_dim] * (num_layers - 1)
        dims_in = [input_dim] + h
        dims_out = h + [output_dim]

        self.weights = []      # (in_pad, out_pad) pre-transposed, lane-padded
        self.biases2d = []     # (1, out_pad) f32
        self.weights_ref = []  # unpadded f32, for the pure-JAX reference
        self.biases_ref = []

        prev_pad = input_dim   # padded width feeding the next layer
        for n, k in zip(dims_in, dims_out):
            key, wk, bk = jax.random.split(key, 3)
            bound = 1.0 / (n ** 0.5)                  # ~ nn.Linear uniform init
            W = jax.random.uniform(wk, (k, n), jnp.float32, -bound, bound)
            b = jax.random.uniform(bk, (k,), jnp.float32, -bound, bound)
            Wt = jnp.asarray(W.T)                     # (in, out)

            out_pad = _round_up(k, LANE) if lane_pad else k
            # Zero padding: padded input rows multiply the (exactly zero)
            # padded activations of the previous layer; padded output cols
            # have zero weights + zero bias -> stay zero through ReLU.
            Wt_p = jnp.zeros((prev_pad, out_pad), jnp.float32).at[:n, :k].set(Wt)
            b_p = jnp.zeros((1, out_pad), jnp.float32).at[0, :k].set(b)

            self.weights.append(Wt_p.astype(w_store))
            self.biases2d.append(b_p)
            self.weights_ref.append(Wt)
            self.biases_ref.append(b)
            prev_pad = out_pad

    def __call__(self, x, *, tm=None):
        orig_shape = x.shape
        x2d = x.reshape(-1, orig_shape[-1])
        y2d = mlp_forward_pallas(x2d, self.weights, self.biases2d,
                                 self.output_dim, tm=tm,
                                 compute_dtype=self.compute_dtype)
        return y2d.reshape(*orig_shape[:-1], self.output_dim)


def _mlp_reference(x, weights_t, biases, num_layers):
    """Pure-JAX reference matching the PyTorch forward (unpadded weights)."""
    for i, (w_t, b) in enumerate(zip(weights_t, biases)):
        x = x @ w_t + b
        if i < num_layers - 1:
            x = jnp.maximum(x, 0.0)
    return x


if __name__ == "__main__":
    key = jax.random.PRNGKey(0)

    # --- Test 1: small DETR box-head shapes (batch=2, queries=8). -----------
    key, xk, pk = jax.random.split(key, 3)
    batch, queries = 2, 8
    input_dim, hidden_dim, output_dim, num_layers = 4, 32, 4, 3

    x = jax.random.normal(xk, (batch, queries, input_dim), jnp.float32)
    mlp = MLPPallas(input_dim, hidden_dim, output_dim, num_layers, pk)

    out = jax.block_until_ready(mlp(x))
    ref = _mlp_reference(x, mlp.weights_ref, mlp.biases_ref, num_layers)
    assert out.shape == (batch, queries, output_dim), out.shape
    assert jnp.allclose(out, ref, atol=1e-5, rtol=1e-5), "mismatch (small)"

    # --- Test 2: DETR-ish shapes exercising auto M tiling (M=200 -> tm=40,
    #     grid=(5,), no wrapper pad/slice on M). -----------------------------
    key, xk2, pk2 = jax.random.split(key, 3)
    batch2, queries2 = 2, 100
    in2, hid2, out2, nl2 = 64, 256, 4, 3
    x2 = jax.random.normal(xk2, (batch2, queries2, in2), jnp.float32)
    mlp2 = MLPPallas(in2, hid2, out2, nl2, pk2)

    y2 = jax.block_until_ready(mlp2(x2))
    ref2 = _mlp_reference(x2, mlp2.weights_ref, mlp2.biases_ref, nl2)
    assert y2.shape == (batch2, queries2, out2), y2.shape
    assert jnp.allclose(y2, ref2, atol=2e-4, rtol=2e-4), "mismatch (tiled)"

    # --- Test 3: bf16 compute path (weights stored bf16, f32 accumulate). ---
    key, xk3, pk3 = jax.random.split(key, 3)
    x3 = jax.random.normal(xk3, (batch2, queries2, in2), jnp.float32)
    mlp3 = MLPPallas(in2, hid2, out2, nl2, pk3, compute_dtype=jnp.bfloat16)
    y3 = jax.block_until_ready(mlp3(x3))
    ref3 = _mlp_reference(x3, mlp3.weights_ref, mlp3.biases_ref, nl2)
    assert y3.shape == (batch2, queries2, out2), y3.shape
    assert jnp.allclose(y3, ref3, atol=5e-2, rtol=5e-2), "mismatch (bf16)"

    print("KERNEL_OK")
</pallas_src>

<mosaic_0001>
module attributes {stable_mosaic.version = 11 : i64} {
  func.func @_fused_mlp_kernel(%arg0: i32, %arg1: memref<16x4xf32, #tpu.memory_space<vmem>>, %arg2: memref<4x128xf32, #tpu.memory_space<vmem>>, %arg3: memref<1x128xf32, #tpu.memory_space<vmem>>, %arg4: memref<128x128xf32, #tpu.memory_space<vmem>>, %arg5: memref<1x128xf32, #tpu.memory_space<vmem>>, %arg6: memref<128x128xf32, #tpu.memory_space<vmem>>, %arg7: memref<1x128xf32, #tpu.memory_space<vmem>>, %arg8: memref<16x128xf32, #tpu.memory_space<vmem>>) attributes {dimension_semantics = [#tpu.dimension_semantics<parallel>], iteration_bounds = array<i64: 1>, scalar_prefetch = 0 : i64, scratch_operands = 0 : i64, tpu.core_type = #tpu.core_type<tc>, window_params = [{transform_indices = @transform_0, window_bounds = array<i64: 16, 4>}, {pipeline_mode = #tpu.pipeline_mode<synchronous>, transform_indices = @transform_1, window_bounds = array<i64: 4, 128>}, {pipeline_mode = #tpu.pipeline_mode<synchronous>, transform_indices = @transform_2, window_bounds = array<i64: 1, 128>}, {pipeline_mode = #tpu.pipeline_mode<synchronous>, transform_indices = @transform_3, window_bounds = array<i64: 128, 128>}, {pipeline_mode = #tpu.pipeline_mode<synchronous>, transform_indices = @transform_4, window_bounds = array<i64: 1, 128>}, {pipeline_mode = #tpu.pipeline_mode<synchronous>, transform_indices = @transform_5, window_bounds = array<i64: 128, 128>}, {pipeline_mode = #tpu.pipeline_mode<synchronous>, transform_indices = @transform_6, window_bounds = array<i64: 1, 128>}, {transform_indices = @transform_7, window_bounds = array<i64: 16, 128>}]} {
    %c0 = arith.constant 0 : index
    %c0_0 = arith.constant 0 : index
    %0 = vector.load %arg1[%c0, %c0_0] : memref<16x4xf32, #tpu.memory_space<vmem>>, vector<16x4xf32>
    %c0_1 = arith.constant 0 : index
    %c0_2 = arith.constant 0 : index
    %1 = vector.load %arg2[%c0_1, %c0_2] : memref<4x128xf32, #tpu.memory_space<vmem>>, vector<4x128xf32>
    %c0_3 = arith.constant 0 : index
    %c0_4 = arith.constant 0 : index
    %2 = vector.load %arg3[%c0_3, %c0_4] : memref<1x128xf32, #tpu.memory_space<vmem>>, vector<1x128xf32>
    %cst = arith.constant dense<0.000000e+00> : vector<16x128xf32>
    %3 = tpu.matmul %0, %1, %cst {dimension_numbers = #tpu.dot_dimension_numbers<[1], [0], [0], [1], [0, 0, 1, 1], [], []>} : vector<16x4xf32>, vector<4x128xf32>, vector<16x128xf32> -> vector<16x128xf32>
    %4 = vector.broadcast %2 : vector<1x128xf32> to vector<16x128xf32>
    %5 = arith.addf %3, %4 : vector<16x128xf32>
    %cst_5 = arith.constant 0.000000e+00 : f32
    %6 = vector.broadcast %cst_5 : f32 to vector<16x128xf32>
    %7 = arith.maximumf %5, %6 : vector<16x128xf32>
    %c0_6 = arith.constant 0 : index
    %c0_7 = arith.constant 0 : index
    %8 = vector.load %arg4[%c0_6, %c0_7] : memref<128x128xf32, #tpu.memory_space<vmem>>, vector<128x128xf32>
    %c0_8 = arith.constant 0 : index
    %c0_9 = arith.constant 0 : index
    %9 = vector.load %arg5[%c0_8, %c0_9] : memref<1x128xf32, #tpu.memory_space<vmem>>, vector<1x128xf32>
    %cst_10 = arith.constant dense<0.000000e+00> : vector<16x128xf32>
    %10 = tpu.matmul %7, %8, %cst_10 {dimension_numbers = #tpu.dot_dimension_numbers<[1], [0], [0], [1], [0, 0, 1, 1], [], []>} : vector<16x128xf32>, vector<128x128xf32>, vector<16x128xf32> -> vector<16x128xf32>
    %11 = vector.broadcast %9 : vector<1x128xf32> to vector<16x128xf32>
    %12 = arith.addf %10, %11 : vector<16x128xf32>
    %cst_11 = arith.constant 0.000000e+00 : f32
    %13 = vector.broadcast %cst_11 : f32 to vector<16x128xf32>
    %14 = arith.maximumf %12, %13 : vector<16x128xf32>
    %c0_12 = arith.constant 0 : index
    %c0_13 = arith.constant 0 : index
    %15 = vector.load %arg6[%c0_12, %c0_13] : memref<128x128xf32, #tpu.memory_space<vmem>>, vector<128x128xf32>
    %c0_14 = arith.constant 0 : index
    %c0_15 = arith.constant 0 : index
    %16 = vector.load %arg7[%c0_14, %c0_15] : memref<1x128xf32, #tpu.memory_space<vmem>>, vector<1x128xf32>
    %cst_16 = arith.constant dense<0.000000e+00> : vector<16x128xf32>
    %17 = tpu.matmul %14, %15, %cst_16 {dimension_numbers = #tpu.dot_dimension_numbers<[1], [0], [0], [1], [0, 0, 1, 1], [], []>} : vector<16x128xf32>, vector<128x128xf32>, vector<16x128xf32> -> vector<16x128xf32>
    %18 = vector.broadcast %16 : vector<1x128xf32> to vector<16x128xf32>
    %19 = arith.addf %17, %18 : vector<16x128xf32>
    %c0_17 = arith.constant 0 : index
    %c0_18 = arith.constant 0 : index
    %20 = vector.load %arg8[%c0_17, %c0_18] : memref<16x128xf32, #tpu.memory_space<vmem>>, vector<16x128xf32>
    tpu.vector_store %arg8[%c0_17, %c0_18], %19 {strides = array<i32>} : memref<16x128xf32, #tpu.memory_space<vmem>>, vector<16x128xf32>,
    return
  }
  func.func @transform_0(%arg0: i32) -> (i32, i32) {
    %c0_i32 = arith.constant 0 : i32
    %c0_i32_0 = arith.constant 0 : i32
    return %arg0, %c0_i32 : i32, i32
  }
  func.func @transform_1(%arg0: i32) -> (i32, i32) {
    %c0_i32 = arith.constant 0 : i32
    %c0_i32_0 = arith.constant 0 : i32
    %c0_i32_1 = arith.constant 0 : i32
    return %c0_i32, %c0_i32_0 : i32, i32
  }
  func.func @transform_2(%arg0: i32) -> (i32, i32) {
    %c0_i32 = arith.constant 0 : i32
    %c0_i32_0 = arith.constant 0 : i32
    %c0_i32_1 = arith.constant 0 : i32
    return %c0_i32, %c0_i32_0 : i32, i32
  }
  func.func @transform_3(%arg0: i32) -> (i32, i32) {
    %c0_i32 = arith.constant 0 : i32
    %c0_i32_0 = arith.constant 0 : i32
    %c0_i32_1 = arith.constant 0 : i32
    return %c0_i32, %c0_i32_0 : i32, i32
  }
  func.func @transform_4(%arg0: i32) -> (i32, i32) {
    %c0_i32 = arith.constant 0 : i32
    %c0_i32_0 = arith.constant 0 : i32
    %c0_i32_1 = arith.constant 0 : i32
    return %c0_i32, %c0_i32_0 : i32, i32
  }
  func.func @transform_5(%arg0: i32) -> (i32, i32) {
    %c0_i32 = arith.constant 0 : i32
    %c0_i32_0 = arith.constant 0 : i32
    %c0_i32_1 = arith.constant 0 : i32
    return %c0_i32, %c0_i32_0 : i32, i32
  }
  func.func @transform_6(%arg0: i32) -> (i32, i32) {
    %c0_i32 = arith.constant 0 : i32
    %c0_i32_0 = arith.constant 0 : i32
    %c0_i32_1 = arith.constant 0 : i32
    return %c0_i32, %c0_i32_0 : i32, i32
  }
  func.func @transform_7(%arg0: i32) -> (i32, i32) {
    %c0_i32 = arith.constant 0 : i32
    %c0_i32_0 = arith.constant 0 : i32
    return %arg0, %c0_i32 : i32, i32
  }
}

</mosaic_0001>

<llo_original>
// kernel: tpu_custom_call.1
$region0: #{tpu_custom_call.1}
  #allocation0 [shape = 'u32[]', space=smem, size = 0x4, offset = 0x4, fixed_abs, tag = 'smem constant byte address 0x4 - core index']
  #allocation1 [shape = 'u32[144,128]{1,0:T(1,128)}', space=vmem, size = 0x12000, scoped, tag = 'internal scratch']
  %s0 = inlined_call_operand.vmem [shape: f32[16,4], index: 0, kind: input, shape index: {}]
  %s1 = inlined_call_operand.vmem [shape: f32[4,128], index: 1, kind: input, shape index: {}]
  %s2 = inlined_call_operand.vmem [shape: f32[1,128], index: 2, kind: input, shape index: {}]
  %s3 = inlined_call_operand.hbm [shape: f32[128,128], index: 3, kind: input, shape index: {}]
  %s4 = inlined_call_operand.vmem [shape: f32[1,128], index: 4, kind: input, shape index: {}]
  %s5 = inlined_call_operand.hbm [shape: f32[128,128], index: 5, kind: input, shape index: {}]
  %s6 = inlined_call_operand.vmem [shape: f32[1,128], index: 6, kind: input, shape index: {}]
  %s7 = inlined_call_operand.hbm [shape: f32[16,128], index: 7, kind: output, shape index: {}]
  %s8 = sld [smem:[#allocation0]]
  $region46: #{tpu_custom_call.1} parent=0
    _
  %s10 = ssub.s32 1, %s8
  %s11 = scalar_select 0, %s10, %s8
  $region1: #{tpu_custom_call.1} parent=0
    #allocation2 [shape = 'u8[65536]{0}', space=vmem, size = 0x10000, scoped, tag = 'input window, operand 3, single buffered']
    #allocation3 [shape = 's32[1]{0}', space=sflag, size = 0x4, scoped, tag = 'scoped memory for tpu_custom_call.1']
    #allocation4 [shape = 's32[1]{0}', space=sflag, size = 0x4, scoped, tag = 'scoped memory for tpu_custom_call.1']
    #allocation5 [shape = 'u8[65536]{0}', space=vmem, size = 0x10000, scoped, tag = 'input window, operand 5, single buffered']
    #allocation6 [shape = 's32[1]{0}', space=sflag, size = 0x4, scoped, tag = 'scoped memory for tpu_custom_call.1']
    #allocation7 [shape = 'u8[8192]{0}', space=vmem, size = 0x2000, scoped, tag = 'output window, operand 0, single buffered']
    %12 = vsyncpa [#allocation3], 0
    %13 = vsyncpa [#allocation6], 0
    %14 = vsyncpa [#allocation4], 0
    // Predicated region
    $region2: #{tpu_custom_call.1} parent=1 // pred_check
      _
    $region3: #{tpu_custom_call.1} parent=1 // pred_check_branch
      %16 = sbr.rel (0) target = $region5
    $region4: #{tpu_custom_call.1} parent=1 // pred_region
      _
    $region5: #{tpu_custom_call.1} parent=1 // pred_fallthru
      _
    // Predicated region
    $region6: #{tpu_custom_call.1} parent=1 // pred_check
      _
    $region7: #{tpu_custom_call.1} parent=1 // pred_check_branch
      %18 = sbr.rel (0) target = $region9
    $region8: #{tpu_custom_call.1} parent=1 // pred_region
      _
    $region9: #{tpu_custom_call.1} parent=1 // pred_fallthru
      _
    // Predicated region
    $region10: #{tpu_custom_call.1} parent=1 // pred_check
      _
    $region11: #{tpu_custom_call.1} parent=1 // pred_check_branch
      %20 = sbr.rel (0) target = $region13
    $region12: #{tpu_custom_call.1} parent=1 // pred_region
      _
    $region13: #{tpu_custom_call.1} parent=1 // pred_fallthru
      _
    // Predicated region
    $region14: #{tpu_custom_call.1} parent=1 // pred_check
      _
    $region15: #{tpu_custom_call.1} parent=1 // pred_check_branch
      %22 = sbr.rel (0) target = $region17
    $region16: #{tpu_custom_call.1} parent=1 // pred_region
      %s24 = ssub.s32 2048, 2048
      %25 = vsyncadd [#allocation3], %s24
      %s26 = sshll.u32 [#allocation2], 4
      %s27 = int_to_ptr.vmem [resolvable:$true] %s26
      %32 = dma.hbm_to_vmem [thread:$0]  %s3, 2048, %s27, [#allocation3], 128, 128, 8
    $region17: #{tpu_custom_call.1} parent=1 // pred_fallthru
      _
    // Predicated region
    $region18: #{tpu_custom_call.1} parent=1 // pred_check
      _
    $region19: #{tpu_custom_call.1} parent=1 // pred_check_branch
      %34 = sbr.rel (0) target = $region21
    $region20: #{tpu_custom_call.1} parent=1 // pred_region
      _
    $region21: #{tpu_custom_call.1} parent=1 // pred_fallthru
      _
    // Predicated region
    $region22: #{tpu_custom_call.1} parent=1 // pred_check
      _
    $region23: #{tpu_custom_call.1} parent=1 // pred_check_branch
      %36 = sbr.rel (0) target = $region25
    $region24: #{tpu_custom_call.1} parent=1 // pred_region
      %s38 = ssub.s32 2048, 2048
      %39 = vsyncadd [#allocation6], %s38
      %s40 = sshll.u32 [#allocation5], 4
      %s41 = int_to_ptr.vmem [resolvable:$true] %s40
      %46 = dma.hbm_to_vmem [thread:$0]  %s5, 2048, %s41, [#allocation6], 128, 128, 8
    $region25: #{tpu_custom_call.1} parent=1 // pred_fallthru
      _
    // Predicated region
    $region26: #{tpu_custom_call.1} parent=1 // pred_check
      _
    $region27: #{tpu_custom_call.1} parent=1 // pred_check_branch
      %48 = sbr.rel (0) target = $region29
    $region28: #{tpu_custom_call.1} parent=1 // pred_region
      _
    $region29: #{tpu_custom_call.1} parent=1 // pred_fallthru
      _
    // Predicated region
    $region30: #{tpu_custom_call.1} parent=1 // pred_check
      _
    $region31: #{tpu_custom_call.1} parent=1 // pred_check_branch
      %50 = sbr.rel (0) target = $region33
    $region32: #{tpu_custom_call.1} parent=1 // pred_region
      %51 = dma.done [#allocation3], 2048
    $region33: #{tpu_custom_call.1} parent=1 // pred_fallthru
      _
    // Predicated region
    $region34: #{tpu_custom_call.1} parent=1 // pred_check
      _
    $region35: #{tpu_custom_call.1} parent=1 // pred_check_branch
      %53 = sbr.rel (0) target = $region37
    $region36: #{tpu_custom_call.1} parent=1 // pred_region
      %54 = dma.done [#allocation6], 2048
    $region37: #{tpu_custom_call.1} parent=1 // pred_fallthru
      _
    %v55 = vld [vmem:[%s0] sm:$0xff]
    %v56 = vld [vmem:[%s0 + $0x8] sm:$0xff]
    %v57 = vld [vmem:[%s1] sm:$0xf]
    %v58 = vld [vmem:[%s2] sm:$0x1]
    %v60 = vlaneseq
    %v61 = vshrl.u32 %v60, 7
    %v62 = vsub.s32 0, %v61
    %v63 = vrot.slane %v58, %v62
    %vm65 = vcmask 31744
    %v67 = vsel %vm65, %v55, 0
    %v70 = vsel %vm65, %v56, 0
    %vm72 = vcmask 1043456
    %v74 = vsel %vm72, %v57, 0
    %76 = vmatprep.subr.mxu0 0.0
    %77 = vmatpush1.msra.mxu0 0.0
    %78 = vmatprep.subr.mxu0 0.0
    %79 = vmatpush1.msra.mxu0 0.0
    %80 = vmatprep.subr.mxu0 0.0
    %81 = vmatpush1.msra.mxu0 0.0
    %82 = vmatprep.subr.mxu0 0.0
    %83 = vmatpush1.msra.mxu0 0.0
    %84 = vmatprep.subr.mxu0 0.0
    %85 = vmatpush1.msra.mxu0 0.0
    %86 = vmatprep.subr.mxu0 0.0
    %87 = vmatpush1.msra.mxu0 0.0
    %88 = vmatprep.subr.mxu0 0.0
    %89 = vmatpush1.msra.mxu0 0.0
    %90 = vmatprep.subr.mxu0 0.0
    %91 = vmatpush1.msra.mxu0 0.0
    %92 = vmatprep.subr.mxu0 0.0
    %93 = vmatpush1.msra.mxu0 0.0
    %94 = vmatprep.subr.mxu0 0.0
    %95 = vmatpush1.msra.mxu0 0.0
    %96 = vmatprep.subr.mxu0 0.0
    %97 = vmatpush1.msra.mxu0 0.0
    %98 = vmatprep.subr.mxu0 0.0
    %99 = vmatpush1.msra.mxu0 0.0
    %100 = vmatprep.subr.mxu0 0.0
    %101 = vmatpush1.msra.mxu0 0.0
    %102 = vmatprep.subr.mxu0 0.0
    %103 = vmatpush1.msra.mxu0 0.0
    %104 = vmatprep.subr.mxu0 0.0
    %105 = vmatpush1.msra.mxu0 0.0
    %106 = vmatprep.subr.mxu0 0.0
    %107 = vmatpush1.msra.mxu0 %v74
    %108 = vmatprep.subr.mxu0 0.0
    %109 = vmatpush2.msra.mxu0 0.0
    %110 = vmatprep.subr.mxu0 0.0
    %111 = vmatpush2.msra.mxu0 0.0
    %112 = vmatprep.subr.mxu0 0.0
    %113 = vmatpush2.msra.mxu0 0.0
    %114 = vmatprep.subr.mxu0 0.0
    %115 = vmatpush2.msra.mxu0 0.0
    %116 = vmatprep.subr.mxu0 0.0
    %117 = vmatpush2.msra.mxu0 0.0
    %118 = vmatprep.subr.mxu0 0.0
    %119 = vmatpush2.msra.mxu0 0.0
    %120 = vmatprep.subr.mxu0 0.0
    %121 = vmatpush2.msra.mxu0 0.0
    %122 = vmatprep.subr.mxu0 0.0
    %123 = vmatpush2.msra.mxu0 0.0
    %124 = vmatprep.subr.mxu0 0.0
    %125 = vmatpush2.msra.mxu0 0.0
    %126 = vmatprep.subr.mxu0 0.0
    %127 = vmatpush2.msra.mxu0 0.0
    %128 = vmatprep.subr.mxu0 0.0
    %129 = vmatpush2.msra.mxu0 0.0
    %130 = vmatprep.subr.mxu0 0.0
    %131 = vmatpush2.msra.mxu0 0.0
    %132 = vmatprep.subr.mxu0 0.0
    %133 = vmatpush2.msra.mxu0 0.0
    %134 = vmatprep.subr.mxu0 0.0
    %135 = vmatpush2.msra.mxu0 0.0
    %136 = vmatprep.subr.mxu0 0.0
    %137 = vmatpush2.msra.mxu0 0.0
    %138 = vmatprep.subr.mxu0 0.0
    %139 = vmatpush2.msra.mxu0 0.0
    %140 = vmatprep.mubr.f32.mxu0 0.0
    %141 = vmatmul.mubr.f32.gmra.mxu0 %v67
    %v142 = vpop.f32.mrf.mxu0
    %v143 = vadd.f32 %v63, %v142
    %v144 = vpop.f32.mrf.mxu0
    %145 = vmatprep.mubr.f32.mxu0 0.0
    %146 = vmatmul.mubr.f32.gmra.mxu0 %v70
    %v147 = vpop.f32.mrf.mxu0
    %v148 = vadd.f32 %v63, %v147
    %v149 = vpop.f32.mrf.mxu0
    %150 = vdwg.mxu0
    %v151 = vmax.f32 %v143, 0.0
    %v152 = vmax.f32 %v148, 0.0
    %v153 = vld [vmem:[#allocation2] sm:$0xff]
    %v154 = vld [vmem:[#allocation2 + $0x8] sm:$0xff]
    %v155 = vld [vmem:[#allocation2 + $0x10] sm:$0xff]
    %v156 = vld [vmem:[#allocation2 + $0x18] sm:$0xff]
    %v157 = vld [vmem:[#allocation2 + $0x20] sm:$0xff]
    %v158 = vld [vmem:[#allocation2 + $0x28] sm:$0xff]
    %v159 = vld [vmem:[#allocation2 + $0x30] sm:$0xff]
    %v160 = vld [vmem:[#allocation2 + $0x38] sm:$0xff]
    %v161 = vld [vmem:[#allocation2 + $0x40] sm:$0xff]
    %v162 = vld [vmem:[#allocation2 + $0x48] sm:$0xff]
    %v163 = vld [vmem:[#allocation2 + $0x50] sm:$0xff]
    %v164 = vld [vmem:[#allocation2 + $0x58] sm:$0xff]
    %v165 = vld [vmem:[#allocation2 + $0x60] sm:$0xff]
    %v166 = vld [vmem:[#allocation2 + $0x68] sm:$0xff]
    %v167 = vld [vmem:[#allocation2 + $0x70] sm:$0xff]
    %v168 = vld [vmem:[#allocation2 + $0x78] sm:$0xff]
    %v169 = vld [vmem:[%s4] sm:$0x1]
    %v171 = vlaneseq
    %v172 = vshrl.u32 %v171, 7
    %v173 = vsub.s32 0, %v172
    %v174 = vrot.slane %v169, %v173
    %176 = vmatprep.subr.mxu0 0.0
    %177 = vmatpush1.msra.mxu0 %v168
    %178 = vmatprep.subr.mxu0 0.0
    %179 = vmatpush1.msra.mxu0 %v167
    %180 = vmatprep.subr.mxu0 0.0
    %181 = vmatpush1.msra.mxu0 %v166
    %182 = vmatprep.subr.mxu0 0.0
    %183 = vmatpush1.msra.mxu0 %v165
    %184 = vmatprep.subr.mxu0 0.0
    %185 = vmatpush1.msra.mxu0 %v164
    %186 = vmatprep.subr.mxu0 0.0
    %187 = vmatpush1.msra.mxu0 %v163
    %188 = vmatprep.subr.mxu0 0.0
    %189 = vmatpush1.msra.mxu0 %v162
    %190 = vmatprep.subr.mxu0 0.0
    %191 = vmatpush1.msra.mxu0 %v161
    %192 = vmatprep.subr.mxu0 0.0
    %193 = vmatpush1.msra.mxu0 %v160
    %194 = vmatprep.subr.mxu0 0.0
    %195 = vmatpush1.msra.mxu0 %v159
    %196 = vmatprep.subr.mxu0 0.0
    %197 = vmatpush1.msra.mxu0 %v158
    %198 = vmatprep.subr.mxu0 0.0
    %199 = vmatpush1.msra.mxu0 %v157
    %200 = vmatprep.subr.mxu0 0.0
    %201 = vmatpush1.msra.mxu0 %v156
    %202 = vmatprep.subr.mxu0 0.0
    %203 = vmatpush1.msra.mxu0 %v155
    %204 = vmatprep.subr.mxu0 0.0
    %205 = vmatpush1.msra.mxu0 %v154
    %206 = vmatprep.subr.mxu0 0.0
    %207 = vmatpush1.msra.mxu0 %v153
    %208 = vmatprep.subr.mxu0 0.0
    %209 = vmatpush2.msra.mxu0 0.0
    %210 = vmatprep.subr.mxu0 0.0
    %211 = vmatpush2.msra.mxu0 0.0
    %212 = vmatprep.subr.mxu0 0.0
    %213 = vmatpush2.msra.mxu0 0.0
    %214 = vmatprep.subr.mxu0 0.0
    %215 = vmatpush2.msra.mxu0 0.0
    %216 = vmatprep.subr.mxu0 0.0
    %217 = vmatpush2.msra.mxu0 0.0
    %218 = vmatprep.subr.mxu0 0.0
    %219 = vmatpush2.msra.mxu0 0.0
    %220 = vmatprep.subr.mxu0 0.0
    %221 = vmatpush2.msra.mxu0 0.0
    %222 = vmatprep.subr.mxu0 0.0
    %223 = vmatpush2.msra.mxu0 0.0
    %224 = vmatprep.subr.mxu0 0.0
    %225 = vmatpush2.msra.mxu0 0.0
    %226 = vmatprep.subr.mxu0 0.0
    %227 = vmatpush2.msra.mxu0 0.0
    %228 = vmatprep.subr.mxu0 0.0
    %229 = vmatpush2.msra.mxu0 0.0
    %230 = vmatprep.subr.mxu0 0.0
    %231 = vmatpush2.msra.mxu0 0.0
    %232 = vmatprep.subr.mxu0 0.0
    %233 = vmatpush2.msra.mxu0 0.0
    %234 = vmatprep.subr.mxu0 0.0
    %235 = vmatpush2.msra.mxu0 0.0
    %236 = vmatprep.subr.mxu0 0.0
    %237 = vmatpush2.msra.mxu0 0.0
    %238 = vmatprep.subr.mxu0 0.0
    %239 = vmatpush2.msra.mxu0 0.0
    %240 = vmatprep.mubr.f32.mxu0 0.0
    %241 = vmatmul.mubr.f32.gmra.mxu0 %v151
    %v242 = vpop.f32.mrf.mxu0
    %v243 = vadd.f32 %v174, %v242
    %v244 = vpop.f32.mrf.mxu0
    %245 = vmatprep.mubr.f32.mxu0 0.0
    %246 = vmatmul.mubr.f32.gmra.mxu0 %v152
    %v247 = vpop.f32.mrf.mxu0
    %v248 = vadd.f32 %v174, %v247
    %v249 = vpop.f32.mrf.mxu0
    %250 = vdwg.mxu0
    %v251 = vmax.f32 %v243, 0.0
    %v252 = vmax.f32 %v248, 0.0
    %v253 = vld [vmem:[#allocation5] sm:$0xff]
    %v254 = vld [vmem:[#allocation5 + $0x8] sm:$0xff]
    %v255 = vld [vmem:[#allocation5 + $0x10] sm:$0xff]
    %v256 = vld [vmem:[#allocation5 + $0x18] sm:$0xff]
    %v257 = vld [vmem:[#allocation5 + $0x20] sm:$0xff]
    %v258 = vld [vmem:[#allocation5 + $0x28] sm:$0xff]
    %v259 = vld [vmem:[#allocation5 + $0x30] sm:$0xff]
    %v260 = vld [vmem:[#allocation5 + $0x38] sm:$0xff]
    %v261 = vld [vmem:[#allocation5 + $0x40] sm:$0xff]
    %v262 = vld [vmem:[#allocation5 + $0x48] sm:$0xff]
    %v263 = vld [vmem:[#allocation5 + $0x50] sm:$0xff]
    %v264 = vld [vmem:[#allocation5 + $0x58] sm:$0xff]
    %v265 = vld [vmem:[#allocation5 + $0x60] sm:$0xff]
    %v266 = vld [vmem:[#allocation5 + $0x68] sm:$0xff]
    %v267 = vld [vmem:[#allocation5 + $0x70] sm:$0xff]
    %v268 = vld [vmem:[#allocation5 + $0x78] sm:$0xff]
    %v269 = vld [vmem:[%s6] sm:$0x1]
    %v271 = vlaneseq
    %v272 = vshrl.u32 %v271, 7
    %v273 = vsub.s32 0, %v272
    %v274 = vrot.slane %v269, %v273
    %276 = vmatprep.subr.mxu0 0.0
    %277 = vmatpush1.msra.mxu0 %v268
    %278 = vmatprep.subr.mxu0 0.0
    %279 = vmatpush1.msra.mxu0 %v267
    %280 = vmatprep.subr.mxu0 0.0
    %281 = vmatpush1.msra.mxu0 %v266
    %282 = vmatprep.subr.mxu0 0.0
    %283 = vmatpush1.msra.mxu0 %v265
    %284 = vmatprep.subr.mxu0 0.0
    %285 = vmatpush1.msra.mxu0 %v264
    %286 = vmatprep.subr.mxu0 0.0
    %287 = vmatpush1.msra.mxu0 %v263
    %288 = vmatprep.subr.mxu0 0.0
    %289 = vmatpush1.msra.mxu0 %v262
    %290 = vmatprep.subr.mxu0 0.0
    %291 = vmatpush1.msra.mxu0 %v261
    %292 = vmatprep.subr.mxu0 0.0
    %293 = vmatpush1.msra.mxu0 %v260
    %294 = vmatprep.subr.mxu0 0.0
    %295 = vmatpush1.msra.mxu0 %v259
    %296 = vmatprep.subr.mxu0 0.0
    %297 = vmatpush1.msra.mxu0 %v258
    %298 = vmatprep.subr.mxu0 0.0
    %299 = vmatpush1.msra.mxu0 %v257
    %300 = vmatprep.subr.mxu0 0.0
    %301 = vmatpush1.msra.mxu0 %v256
    %302 = vmatprep.subr.mxu0 0.0
    %303 = vmatpush1.msra.mxu0 %v255
    %304 = vmatprep.subr.mxu0 0.0
    %305 = vmatpush1.msra.mxu0 %v254
    %306 = vmatprep.subr.mxu0 0.0
    %307 = vmatpush1.msra.mxu0 %v253
    %308 = vmatprep.subr.mxu0 0.0
    %309 = vmatpush2.msra.mxu0 0.0
    %310 = vmatprep.subr.mxu0 0.0
    %311 = vmatpush2.msra.mxu0 0.0
    %312 = vmatprep.subr.mxu0 0.0
    %313 = vmatpush2.msra.mxu0 0.0
    %314 = vmatprep.subr.mxu0 0.0
    %315 = vmatpush2.msra.mxu0 0.0
    %316 = vmatprep.subr.mxu0 0.0
    %317 = vmatpush2.msra.mxu0 0.0
    %318 = vmatprep.subr.mxu0 0.0
    %319 = vmatpush2.msra.mxu0 0.0
    %320 = vmatprep.subr.mxu0 0.0
    %321 = vmatpush2.msra.mxu0 0.0
    %322 = vmatprep.subr.mxu0 0.0
    %323 = vmatpush2.msra.mxu0 0.0
    %324 = vmatprep.subr.mxu0 0.0
    %325 = vmatpush2.msra.mxu0 0.0
    %326 = vmatprep.subr.mxu0 0.0
    %327 = vmatpush2.msra.mxu0 0.0
    %328 = vmatprep.subr.mxu0 0.0
    %329 = vmatpush2.msra.mxu0 0.0
    %330 = vmatprep.subr.mxu0 0.0
    %331 = vmatpush2.msra.mxu0 0.0
    %332 = vmatprep.subr.mxu0 0.0
    %333 = vmatpush2.msra.mxu0 0.0
    %334 = vmatprep.subr.mxu0 0.0
    %335 = vmatpush2.msra.mxu0 0.0
    %336 = vmatprep.subr.mxu0 0.0
    %337 = vmatpush2.msra.mxu0 0.0
    %338 = vmatprep.subr.mxu0 0.0
    %339 = vmatpush2.msra.mxu0 0.0
    %340 = vmatprep.mubr.f32.mxu0 0.0
    %341 = vmatmul.mubr.f32.gmra.mxu0 %v251
    %v342 = vpop.f32.mrf.mxu0
    %v343 = vadd.f32 %v274, %v342
    %v344 = vpop.f32.mrf.mxu0
    %345 = vmatprep.mubr.f32.mxu0 0.0
    %346 = vmatmul.mubr.f32.gmra.mxu0 %v252
    %v347 = vpop.f32.mrf.mxu0
    %v348 = vadd.f32 %v274, %v347
    %v349 = vpop.f32.mrf.mxu0
    %350 = vdwg.mxu0
    %351 = vst [vmem:[#allocation7] sm:$0xff] %v343
    %352 = vst [vmem:[#allocation7 + $0x8] sm:$0xff] %v348
    // Predicated region
    $region38: #{tpu_custom_call.1} parent=1 // pred_check
      _
    $region39: #{tpu_custom_call.1} parent=1 // pred_check_branch
      %354 = sbr.rel (0) target = $region41
    $region40: #{tpu_custom_call.1} parent=1 // pred_region
      %s356 = ssub.s32 256, 256
      %357 = vsyncadd [#allocation4], %s356
      %s358 = sshll.u32 [#allocation7], 4
      %s359 = int_to_ptr.vmem [resolvable:$true] %s358
      %364 = dma.vmem_to_hbm [thread:$0]  %s359, 256, %s7, [#allocation4], 128, 128, 8
    $region41: #{tpu_custom_call.1} parent=1 // pred_fallthru
      _
    // Predicated region
    $region42: #{tpu_custom_call.1} parent=1 // pred_check
      _
    $region43: #{tpu_custom_call.1} parent=1 // pred_check_branch
      %366 = sbr.rel (0) target = $region45
    $region44: #{tpu_custom_call.1} parent=1 // pred_region
      %367 = dma.done [#allocation4], 256
    $region45: #{tpu_custom_call.1} parent=1 // pred_fallthru
      _
    %368 = vsyncpa [#allocation3], 1
    %369 = vsyncpa [#allocation6], 1
    %370 = vsyncpa [#allocation4], 1

</llo_original>
